<compile_context>
chip_gen: v5e
topology: v5e:2x2
jax: 0.10.0
libtpu: 0.0.40
codegen_flags: <defaults>
</compile_context>

<pallas_src>
import jax
import jax.numpy as jnp
from jax.experimental import pallas as pl
from jax.experimental.pallas import tpu as pltpu


def _round_up(x, m):
    return (x + m - 1) // m * m


def _choose_tiles(B, S, H, itemsize, x_budget_bytes):
    """Alignment-aware tile selection.

    tile_b: multiple of 8 (sublane); 128 once the batch is large enough, which
    gives an unmasked lane-dense output block, a proper MXU M dim, and >=2
    (typically >=4) batch grid steps to feed/pipeline both v7x TensorCores.
    tile_s: multiple of 8 sized so the double-buffered (tile_b, tile_s, H) x
    block stays within the streaming budget — decouples tile_b from S*H.
    """
    B8 = _round_up(B, 8)
    tile_b = 128 if B8 >= 256 else B8
    # Never let even the minimal tile_s=8 block exceed the budget.
    max_tb = max(8, (x_budget_bytes // (2 * 8 * H * itemsize)) // 8 * 8)
    tile_b = min(tile_b, max_tb)

    row_bytes = tile_b * H * itemsize
    max_ts = max(8, (x_budget_bytes // (2 * row_bytes)) // 8 * 8)
    tile_s = min(_round_up(S, 8), max_ts)
    return tile_b, tile_s


def _make_kernel(seq_len):
    inv_s = 1.0 / float(seq_len)  # true (unpadded) sequence length

    def dnn_kernel(x_ref, w1_ref, b1_ref, w2_ref, b2_ref, o_ref, acc_ref):
        # x_ref : (TB, TS, H)  batch x seq tile of activations
        # w1_ref: (H, HID)     fc1 weight (VMEM, resident across grid steps)
        # b1_ref: (1, HID)     fc1 bias   (VMEM, resident)
        # w2_ref: (1, HID)     fc2 weight as a row vector (VPU path)
        # b2_ref: (1,)         fc2 bias, SMEM scalar
        # o_ref : (1, 1, TB)   lane-dense output block (written on last seq step)
        # acc_ref: (TB, H)     f32 sequence-sum accumulator (VMEM scratch)
        s = pl.program_id(1)

        @pl.when(s == 0)
        def _():
            acc_ref[...] = jnp.zeros_like(acc_ref)

        # Partial sum over this sequence tile with an f32 accumulator; no full
        # f32 copy of the x tile is materialized (bf16 x streams straight in).
        acc_ref[...] += jnp.sum(x_ref[...], axis=1, dtype=jnp.float32)

        @pl.when(s == pl.num_programs(1) - 1)
        def _():
            pooled = acc_ref[...] * inv_s                                   # (TB, H)

            # fc1 + ReLU: MXU matmul in the weight dtype, f32 accumulation.
            h = jnp.dot(pooled.astype(w1_ref.dtype), w1_ref[...],
                        preferred_element_type=jnp.float32)
            h = jnp.maximum(h + b1_ref[...].astype(jnp.float32), 0.0)       # (TB, HID)

            # fc2 (N=1): VPU multiply + XLU lane reduction instead of a
            # degenerate (TB,HID)@(HID,1) MXU op, then exact sigmoid (exp on
            # the EUP; exact divide keeps 1e-5 parity with the f32 reference).
            z = jnp.sum(h * w2_ref[...].astype(jnp.float32), axis=-1) + b2_ref[0]
            y = 1.0 / (1.0 + jnp.exp(-z))                                   # (TB,)

            o_ref[...] = y.reshape(o_ref.shape).astype(o_ref.dtype)

    return dnn_kernel


def my_dnn_forward(x, w1, b1, w2, b2, *,
                   tile_b=None, tile_s=None, x_vmem_budget_bytes=16 << 20):
    B, S, H = x.shape
    Hid = w1.shape[1]
    assert w1.shape[0] == H

    b1_row = jnp.asarray(b1).reshape(1, Hid)
    w2_row = jnp.asarray(w2).reshape(1, Hid)                 # (Hid,1)/(1,Hid) -> (1,Hid)
    b2_sc = jnp.asarray(b2, dtype=jnp.float32).reshape(1)    # SMEM scalar

    itemsize = x.dtype.itemsize
    auto_tb, auto_ts = _choose_tiles(B, S, H, itemsize, x_vmem_budget_bytes)
    tile_b = auto_tb if tile_b is None else tile_b
    tile_s = auto_ts if tile_s is None else tile_s

    # Pad instead of asserting divisibility: zero seq rows add nothing to the
    # sum (mean uses the true S); padded batch rows are sliced off at the end.
    B_pad = _round_up(B, tile_b)
    S_pad = _round_up(S, tile_s)
    if (B_pad, S_pad) != (B, S):
        x = jnp.pad(x, ((0, B_pad - B), (0, S_pad - S), (0, 0)))
    num_b = B_pad // tile_b
    num_s = S_pad // tile_s

    # Explicit VMEM limit matching the streaming budget (don't rely on the
    # per-generation scoped default; v5e's is only 16 MiB).
    nbytes = lambda a: a.size * a.dtype.itemsize
    x_block_bytes = 2 * tile_b * tile_s * H * itemsize                 # double-buffered
    param_bytes = 2 * (nbytes(w1) + nbytes(b1_row) + nbytes(w2_row))   # double-buffered
    scratch_bytes = tile_b * H * 4 + 2 * tile_b * 4                    # acc + out blocks
    vmem_limit = int(x_block_bytes + param_bytes + scratch_bytes + (4 << 20))
    vmem_limit = max(16 << 20, min(vmem_limit, 48 << 20))              # safe on v5e/v6e/v7x

    cost = pl.CostEstimate(
        flops=2 * B_pad * H * Hid + B_pad * S_pad * H + 2 * B_pad * Hid,
        transcendentals=B_pad,
        bytes_accessed=nbytes(x) + nbytes(w1) + nbytes(b1_row)
                       + nbytes(w2_row) + nbytes(b2_sc) + num_b * tile_b * 4,
    )

    # TODO(synk): single-buffer the resident w1/b1/w2 specs with
    # pipeline_mode=pl.Buffered(1) once verified to lower on the target jax.
    out = pl.pallas_call(
        _make_kernel(S),
        out_shape=jax.ShapeDtypeStruct((num_b, 1, tile_b), jnp.float32),
        grid_spec=pltpu.PrefetchScalarGridSpec(
            num_scalar_prefetch=0,
            grid=(num_b, num_s),                                       # seq (reduction) last
            in_specs=[
                pl.BlockSpec((tile_b, tile_s, H), lambda i, s: (i, s, 0)),  # streamed x
                pl.BlockSpec((H, Hid), lambda i, s: (0, 0)),                # resident w1
                pl.BlockSpec((1, Hid), lambda i, s: (0, 0)),                # resident b1
                pl.BlockSpec((1, Hid), lambda i, s: (0, 0)),                # resident w2 row
                pl.BlockSpec(memory_space=pltpu.MemorySpace.SMEM),          # b2 scalar
            ],
            out_specs=pl.BlockSpec((1, 1, tile_b), lambda i, s: (i, 0, 0)),
            scratch_shapes=[pltpu.VMEM((tile_b, H), jnp.float32)],          # seq-sum acc
        ),
        compiler_params=pltpu.CompilerParams(
            dimension_semantics=("parallel", "arbitrary"),
            vmem_limit_bytes=vmem_limit,
        ),
        cost_estimate=cost,
    )(x, w1, b1_row, w2_row, b2_sc)

    return out.reshape(B_pad, 1)[:B]


if __name__ == "__main__":
    # Small shapes consistent with the module: (batch, seq, hidden).
    # train_data.shape[2] (the BERT hidden size) is stood in by H=128.
    B, S, H, HID = 8, 8, 128, 256

    key = jax.random.PRNGKey(0)
    kx, kw1, kb1, kw2, kb2 = jax.random.split(key, 5)

    x = jax.random.normal(kx, (B, S, H), dtype=jnp.float32)

    # Deterministic parameter init (nn.Linear-style fan-in scaling).
    w1 = jax.random.uniform(kw1, (H, HID), jnp.float32, -1.0, 1.0) / jnp.sqrt(H)
    b1 = jax.random.uniform(kb1, (1, HID), jnp.float32, -1.0, 1.0) / jnp.sqrt(H)
    w2 = jax.random.uniform(kw2, (HID, 1), jnp.float32, -1.0, 1.0) / jnp.sqrt(HID)
    b2 = jax.random.uniform(kb2, (1, 1), jnp.float32, -1.0, 1.0) / jnp.sqrt(HID)

    out = jax.block_until_ready(my_dnn_forward(x, w1, b1, w2, b2))

    # Pure-JAX reference.
    pooled = jnp.mean(x, axis=1)
    ref = jax.nn.sigmoid(jnp.maximum(pooled @ w1 + b1, 0.0) @ w2 + b2)
    assert out.shape == (B, 1)
    assert jnp.allclose(out, ref, atol=1e-5, rtol=1e-5)

    print("KERNEL_OK")
</pallas_src>

<mosaic_0001>
module attributes {stable_mosaic.version = 11 : i64} {
  func.func @dnn_kernel(%arg0: i32, %arg1: i32, %arg2: memref<8x8x128xf32, #tpu.memory_space<vmem>>, %arg3: memref<128x256xf32, #tpu.memory_space<vmem>>, %arg4: memref<1x256xf32, #tpu.memory_space<vmem>>, %arg5: memref<1x256xf32, #tpu.memory_space<vmem>>, %arg6: memref<1xf32, #tpu.memory_space<smem>>, %arg7: memref<1x1x8xf32, #tpu.memory_space<vmem>>, %arg8: memref<8x128xf32, #tpu.memory_space<vmem>>) attributes {dimension_semantics = [#tpu.dimension_semantics<parallel>, #tpu.dimension_semantics<arbitrary>], iteration_bounds = array<i64: 1, 1>, scalar_prefetch = 0 : i64, scratch_operands = 1 : i64, tpu.core_type = #tpu.core_type<tc>, window_params = [{transform_indices = @transform_0, window_bounds = array<i64: 8, 8, 128>}, {pipeline_mode = #tpu.pipeline_mode<synchronous>, transform_indices = @transform_1, window_bounds = array<i64: 128, 256>}, {pipeline_mode = #tpu.pipeline_mode<synchronous>, transform_indices = @transform_2, window_bounds = array<i64: 1, 256>}, {pipeline_mode = #tpu.pipeline_mode<synchronous>, transform_indices = @transform_3, window_bounds = array<i64: 1, 256>}, {transform_indices = @transform_4, window_bounds = array<i64: 1>}, {transform_indices = @transform_5, window_bounds = array<i64: 1, 1, 8>}]} {
    %c0_i32 = arith.constant 0 : i32
    %0 = arith.cmpi eq, %arg1, %c0_i32 : i32
    %1 = arith.extui %0 : i1 to i32
    %c0_i32_0 = arith.constant 0 : i32
    %2 = arith.cmpi ne, %1, %c0_i32_0 : i32
    scf.if %2 {
      %cst_9 = arith.constant 0.000000e+00 : f32
      %11 = vector.broadcast %cst_9 : f32 to vector<8x128xf32>
      %c0_10 = arith.constant 0 : index
      %c0_11 = arith.constant 0 : index
      %12 = vector.load %arg8[%c0_10, %c0_11] : memref<8x128xf32, #tpu.memory_space<vmem>>, vector<8x128xf32>
      tpu.vector_store %arg8[%c0_10, %c0_11], %11 {strides = array<i32>} : memref<8x128xf32, #tpu.memory_space<vmem>>, vector<8x128xf32>,
    } else {
    }
    %c0 = arith.constant 0 : index
    %c0_1 = arith.constant 0 : index
    %3 = vector.load %arg8[%c0, %c0_1] : memref<8x128xf32, #tpu.memory_space<vmem>>, vector<8x128xf32>
    %c0_2 = arith.constant 0 : index
    %c0_3 = arith.constant 0 : index
    %c0_4 = arith.constant 0 : index
    %4 = vector.load %arg2[%c0_2, %c0_3, %c0_4] : memref<8x8x128xf32, #tpu.memory_space<vmem>>, vector<8x8x128xf32>
    %cst = arith.constant dense<0.000000e+00> : vector<8x128xf32>
    %5 = vector.multi_reduction <add>, %4, %cst [1] : vector<8x8x128xf32> to vector<8x128xf32>
    %6 = arith.addf %3, %5 : vector<8x128xf32>
    %c0_5 = arith.constant 0 : index
    %c0_6 = arith.constant 0 : index
    %7 = vector.load %arg8[%c0_5, %c0_6] : memref<8x128xf32, #tpu.memory_space<vmem>>, vector<8x128xf32>
    tpu.vector_store %arg8[%c0_5, %c0_6], %6 {strides = array<i32>} : memref<8x128xf32, #tpu.memory_space<vmem>>, vector<8x128xf32>,
    %c0_i32_7 = arith.constant 0 : i32
    %8 = arith.cmpi eq, %arg1, %c0_i32_7 : i32
    %9 = arith.extui %8 : i1 to i32
    %c0_i32_8 = arith.constant 0 : i32
    %10 = arith.cmpi ne, %9, %c0_i32_8 : i32
    scf.if %10 {
      %c0_9 = arith.constant 0 : index
      %c0_10 = arith.constant 0 : index
      %11 = vector.load %arg8[%c0_9, %c0_10] : memref<8x128xf32, #tpu.memory_space<vmem>>, vector<8x128xf32>
      %cst_11 = arith.constant 1.250000e-01 : f32
      %12 = vector.broadcast %cst_11 : f32 to vector<8x128xf32>
      %13 = arith.mulf %11, %12 : vector<8x128xf32>
      %c0_12 = arith.constant 0 : index
      %c0_13 = arith.constant 0 : index
      %14 = vector.load %arg3[%c0_12, %c0_13] : memref<128x256xf32, #tpu.memory_space<vmem>>, vector<128x256xf32>
      %cst_14 = arith.constant dense<0.000000e+00> : vector<8x256xf32>
      %15 = tpu.matmul %13, %14, %cst_14 {dimension_numbers = #tpu.dot_dimension_numbers<[1], [0], [0], [1], [0, 0, 1, 1], [], []>} : vector<8x128xf32>, vector<128x256xf32>, vector<8x256xf32> -> vector<8x256xf32>
      %c0_15 = arith.constant 0 : index
      %c0_16 = arith.constant 0 : index
      %16 = vector.load %arg4[%c0_15, %c0_16] : memref<1x256xf32, #tpu.memory_space<vmem>>, vector<1x256xf32>
      %17 = vector.broadcast %16 : vector<1x256xf32> to vector<8x256xf32>
      %18 = arith.addf %15, %17 : vector<8x256xf32>
      %cst_17 = arith.constant 0.000000e+00 : f32
      %19 = vector.broadcast %cst_17 : f32 to vector<8x256xf32>
      %20 = arith.maximumf %18, %19 : vector<8x256xf32>
      %c0_18 = arith.constant 0 : index
      %c0_19 = arith.constant 0 : index
      %21 = vector.load %arg5[%c0_18, %c0_19] : memref<1x256xf32, #tpu.memory_space<vmem>>, vector<1x256xf32>
      %22 = vector.broadcast %21 : vector<1x256xf32> to vector<8x256xf32>
      %23 = arith.mulf %20, %22 : vector<8x256xf32>
      %cst_20 = arith.constant dense<0.000000e+00> : vector<8xf32>
      %24 = vector.multi_reduction <add>, %23, %cst_20 [1] : vector<8x256xf32> to vector<8xf32>
      %c0_21 = arith.constant 0 : index
      %25 = memref.load %arg6[%c0_21] : memref<1xf32, #tpu.memory_space<smem>>
      %26 = vector.broadcast %25 : f32 to vector<8xf32>
      %27 = arith.addf %24, %26 : vector<8xf32>
      %cst_22 = arith.constant 0.000000e+00 : f32
      %28 = vector.broadcast %cst_22 : f32 to vector<8xf32>
      %29 = arith.subf %28, %27 : vector<8xf32>
      %30 = math.exp %29 : vector<8xf32>
      %cst_23 = arith.constant 1.000000e+00 : f32
      %31 = vector.broadcast %cst_23 : f32 to vector<8xf32>
      %32 = arith.addf %31, %30 : vector<8xf32>
      %cst_24 = arith.constant 1.000000e+00 : f32
      %33 = vector.broadcast %cst_24 : f32 to vector<8xf32>
      %34 = arith.divf %33, %32 : vector<8xf32>
      %35 = vector.shape_cast %34 : vector<8xf32> to vector<1x1x8xf32>
      %c0_25 = arith.constant 0 : index
      %c0_26 = arith.constant 0 : index
      %c0_27 = arith.constant 0 : index
      %36 = vector.load %arg7[%c0_25, %c0_26, %c0_27] : memref<1x1x8xf32, #tpu.memory_space<vmem>>, vector<1x1x8xf32>
      tpu.vector_store %arg7[%c0_25, %c0_26, %c0_27], %35 {strides = array<i32>} : memref<1x1x8xf32, #tpu.memory_space<vmem>>, vector<1x1x8xf32>,
    } else {
    }
    return
  }
  func.func @transform_0(%arg0: i32, %arg1: i32) -> (i32, i32, i32) {
    %c0_i32 = arith.constant 0 : i32
    %c0_i32_0 = arith.constant 0 : i32
    return %arg0, %arg1, %c0_i32 : i32, i32, i32
  }
  func.func @transform_1(%arg0: i32, %arg1: i32) -> (i32, i32) {
    %c0_i32 = arith.constant 0 : i32
    %c0_i32_0 = arith.constant 0 : i32
    %c0_i32_1 = arith.constant 0 : i32
    return %c0_i32, %c0_i32_0 : i32, i32
  }
  func.func @transform_2(%arg0: i32, %arg1: i32) -> (i32, i32) {
    %c0_i32 = arith.constant 0 : i32
    %c0_i32_0 = arith.constant 0 : i32
    %c0_i32_1 = arith.constant 0 : i32
    return %c0_i32, %c0_i32_0 : i32, i32
  }
  func.func @transform_3(%arg0: i32, %arg1: i32) -> (i32, i32) {
    %c0_i32 = arith.constant 0 : i32
    %c0_i32_0 = arith.constant 0 : i32
    %c0_i32_1 = arith.constant 0 : i32
    return %c0_i32, %c0_i32_0 : i32, i32
  }
  func.func @transform_4(%arg0: i32, %arg1: i32) -> i32 {
    %c0_i32 = arith.constant 0 : i32
    %c0_i32_0 = arith.constant 0 : i32
    return %c0_i32 : i32
  }
  func.func @transform_5(%arg0: i32, %arg1: i32) -> (i32, i32, i32) {
    %c0_i32 = arith.constant 0 : i32
    %c0_i32_0 = arith.constant 0 : i32
    %c0_i32_1 = arith.constant 0 : i32
    return %arg0, %c0_i32, %c0_i32_0 : i32, i32, i32
  }
}

</mosaic_0001>

<llo_original>
// kernel: tpu_custom_call.1
$region0: #{tpu_custom_call.1}
  #allocation0 [shape = 'u32[]', space=smem, size = 0x4, offset = 0x4, fixed_abs, tag = 'smem constant byte address 0x4 - core index']
  #allocation1 [shape = 'u32[72,128]{1,0:T(1,128)}', space=vmem, size = 0x9000, scoped, tag = 'internal scratch']
  #allocation2 [shape = 'f32[8,128]{1,0:T(8,128)}', space=vmem, size = 0x1000, scoped, tag = 'scratch operand']
  #allocation3 [shape = 'f32[1]{0:T(128)S(6)}', space=smem, size = 0x200, scoped, tag = 'scoped memory for tpu_custom_call.1']
  %s0 = inlined_call_operand.hbm [shape: f32[8,8,128], index: 0, kind: input, shape index: {}]
  %s1 = inlined_call_operand.hbm [shape: f32[128,256], index: 1, kind: input, shape index: {}]
  %s2 = inlined_call_operand.vmem [shape: f32[1,256], index: 2, kind: input, shape index: {}]
  %s3 = inlined_call_operand.vmem [shape: f32[1,256], index: 3, kind: input, shape index: {}]
  %s4 = inlined_call_operand.<no memory space> [shape: f32[1], index: 4, kind: input, shape index: {}]
  %s5 = inlined_call_operand.hbm [shape: f32[1,1,8], index: 5, kind: output, shape index: {}]
  %s6 = sld [smem:[#allocation0]]
  $region46: #{tpu_custom_call.1} parent=0
    _
  %s8 = ssub.s32 1, %s6
  %s9 = scalar_select 0, %s8, %s6
  %10 = sst [smem:[#allocation3]] %s4
  $region1: #{tpu_custom_call.1} parent=0
    #allocation4 [shape = 'u8[32768]{0}', space=vmem, size = 0x8000, scoped, tag = 'input window, operand 0, single buffered']
    #allocation5 [shape = 's32[1]{0}', space=sflag, size = 0x4, scoped, tag = 'scoped memory for tpu_custom_call.1']
    #allocation6 [shape = 's32[1]{0}', space=sflag, size = 0x4, scoped, tag = 'scoped memory for tpu_custom_call.1']
    #allocation7 [shape = 'u8[131072]{0}', space=vmem, size = 0x20000, scoped, tag = 'input window, operand 1, single buffered']
    #allocation8 [shape = 's32[1]{0}', space=sflag, size = 0x4, scoped, tag = 'scoped memory for tpu_custom_call.1']
    #allocation9 [shape = 'u8[512]{0}', space=vmem, size = 0x400, scoped, tag = 'output window, operand 0, single buffered']
    %11 = vsyncpa [#allocation5], 0
    %12 = vsyncpa [#allocation8], 0
    %13 = vsyncpa [#allocation6], 0
    // Predicated region
    $region2: #{tpu_custom_call.1} parent=1 // pred_check
      _
    $region3: #{tpu_custom_call.1} parent=1 // pred_check_branch
      %15 = sbr.rel (0) target = $region5
    $region4: #{tpu_custom_call.1} parent=1 // pred_region
      %17 = vsyncadd [#allocation5], 0
      %s18 = sshll.u32 %s0, 4
      %s19 = int_to_ptr.hbm [resolvable:$true] %s18
      %s20 = sshll.u32 [#allocation4], 4
      %s21 = int_to_ptr.vmem [resolvable:$true] %s20
      %26 = dma.hbm_to_vmem [thread:$0]  %s19, 1024, %s21, [#allocation5], 128, 128, 8
    $region5: #{tpu_custom_call.1} parent=1 // pred_fallthru
      _
    // Predicated region
    $region6: #{tpu_custom_call.1} parent=1 // pred_check
      _
    $region7: #{tpu_custom_call.1} parent=1 // pred_check_branch
      %28 = sbr.rel (0) target = $region9
    $region8: #{tpu_custom_call.1} parent=1 // pred_region
      %30 = vsyncadd [#allocation8], 0
      %s31 = sshll.u32 %s1, 4
      %s32 = int_to_ptr.hbm [resolvable:$true] %s31
      %s33 = sshll.u32 [#allocation7], 4
      %s34 = int_to_ptr.vmem [resolvable:$true] %s33
      %39 = dma.hbm_to_vmem [thread:$0]  %s32, 4096, %s34, [#allocation8], 256, 256, 16
    $region9: #{tpu_custom_call.1} parent=1 // pred_fallthru
      _
    // Predicated region
    $region10: #{tpu_custom_call.1} parent=1 // pred_check
      _
    $region11: #{tpu_custom_call.1} parent=1 // pred_check_branch
      %41 = sbr.rel (0) target = $region13
    $region12: #{tpu_custom_call.1} parent=1 // pred_region
      _
    $region13: #{tpu_custom_call.1} parent=1 // pred_fallthru
      _
    // Predicated region
    $region14: #{tpu_custom_call.1} parent=1 // pred_check
      _
    $region15: #{tpu_custom_call.1} parent=1 // pred_check_branch
      %43 = sbr.rel (0) target = $region17
    $region16: #{tpu_custom_call.1} parent=1 // pred_region
      _
    $region17: #{tpu_custom_call.1} parent=1 // pred_fallthru
      _
    // Predicated region
    $region18: #{tpu_custom_call.1} parent=1 // pred_check
      _
    $region19: #{tpu_custom_call.1} parent=1 // pred_check_branch
      %45 = sbr.rel (0) target = $region21
    $region20: #{tpu_custom_call.1} parent=1 // pred_region
      _
    $region21: #{tpu_custom_call.1} parent=1 // pred_fallthru
      _
    // Predicated region
    $region22: #{tpu_custom_call.1} parent=1 // pred_check
      _
    $region23: #{tpu_custom_call.1} parent=1 // pred_check_branch
      %47 = sbr.rel (0) target = $region25
    $region24: #{tpu_custom_call.1} parent=1 // pred_region
      %49 = dma.done [#allocation5], 1024
    $region25: #{tpu_custom_call.1} parent=1 // pred_fallthru
      _
    // Predicated region
    $region26: #{tpu_custom_call.1} parent=1 // pred_check
      _
    $region27: #{tpu_custom_call.1} parent=1 // pred_check_branch
      %51 = sbr.rel (0) target = $region29
    $region28: #{tpu_custom_call.1} parent=1 // pred_region
      %53 = dma.done [#allocation8], 4096
    $region29: #{tpu_custom_call.1} parent=1 // pred_fallthru
      _
    %p54 = scmp.eq.s32.totalorder 0, 0
    // Predicated region
    $region30: #{tpu_custom_call.1} parent=1 // pred_check
      %p55 = pneg %p54
    $region31: #{tpu_custom_call.1} parent=1 // pred_check_branch
      %57 = sbr.rel (%p55) target = $region33
    $region32: #{tpu_custom_call.1} parent=1 // pred_region
      %58 = vst [vmem:[#allocation2] sm:$0xff] 0.0
    $region33: #{tpu_custom_call.1} parent=1 // pred_fallthru
      _
    %v59 = vld [vmem:[#allocation2] sm:$0xff]
    %v60 = vld [vmem:[#allocation4] sm:$0xff]
    %v61 = vld [vmem:[#allocation4 + $0x8] sm:$0xff]
    %v62 = vld [vmem:[#allocation4 + $0x10] sm:$0xff]
    %v63 = vld [vmem:[#allocation4 + $0x18] sm:$0xff]
    %v64 = vld [vmem:[#allocation4 + $0x20] sm:$0xff]
    %v65 = vld [vmem:[#allocation4 + $0x28] sm:$0xff]
    %v66 = vld [vmem:[#allocation4 + $0x30] sm:$0xff]
    %v67 = vld [vmem:[#allocation4 + $0x38] sm:$0xff]
    %v68 = vrot.slane %v60, 4
    %v69 = vadd.f32 %v60, %v68
    %v70 = vrot.slane %v69, 2
    %v71 = vadd.f32 %v69, %v70
    %v72 = vrot.slane %v71, 1
    %v73 = vadd.f32 %v71, %v72
    %v74 = vrot.slane %v61, 4
    %v75 = vadd.f32 %v61, %v74
    %v76 = vrot.slane %v75, 2
    %v77 = vadd.f32 %v75, %v76
    %v78 = vrot.slane %v77, 1
    %v79 = vadd.f32 %v77, %v78
    %v80 = vrot.slane %v62, 4
    %v81 = vadd.f32 %v62, %v80
    %v82 = vrot.slane %v81, 2
    %v83 = vadd.f32 %v81, %v82
    %v84 = vrot.slane %v83, 1
    %v85 = vadd.f32 %v83, %v84
    %v86 = vrot.slane %v63, 4
    %v87 = vadd.f32 %v63, %v86
    %v88 = vrot.slane %v87, 2
    %v89 = vadd.f32 %v87, %v88
    %v90 = vrot.slane %v89, 1
    %v91 = vadd.f32 %v89, %v90
    %v92 = vrot.slane %v64, 4
    %v93 = vadd.f32 %v64, %v92
    %v94 = vrot.slane %v93, 2
    %v95 = vadd.f32 %v93, %v94
    %v96 = vrot.slane %v95, 1
    %v97 = vadd.f32 %v95, %v96
    %v98 = vrot.slane %v65, 4
    %v99 = vadd.f32 %v65, %v98
    %v100 = vrot.slane %v99, 2
    %v101 = vadd.f32 %v99, %v100
    %v102 = vrot.slane %v101, 1
    %v103 = vadd.f32 %v101, %v102
    %v104 = vrot.slane %v66, 4
    %v105 = vadd.f32 %v66, %v104
    %v106 = vrot.slane %v105, 2
    %v107 = vadd.f32 %v105, %v106
    %v108 = vrot.slane %v107, 1
    %v109 = vadd.f32 %v107, %v108
    %v110 = vrot.slane %v67, 4
    %v111 = vadd.f32 %v67, %v110
    %v112 = vrot.slane %v111, 2
    %v113 = vadd.f32 %v111, %v112
    %v114 = vrot.slane %v113, 1
    %v115 = vadd.f32 %v113, %v114
    %vm124 = vcmask 1041409
    %v125 = vsel %vm124, %v79, %v73
    %vm126 = vcmask 1042434
    %v127 = vsel %vm126, %v85, %v125
    %vm128 = vcmask 1043459
    %v129 = vsel %vm128, %v91, %v127
    %vm130 = vcmask 1044484
    %v131 = vsel %vm130, %v97, %v129
    %vm132 = vcmask 1045509
    %v133 = vsel %vm132, %v103, %v131
    %vm134 = vcmask 1046534
    %v135 = vsel %vm134, %v109, %v133
    %vm136 = vcmask 1047559
    %v137 = vsel %vm136, %v115, %v135
    %v139 = vadd.f32 %v59, %v137
    %140 = vst [vmem:[#allocation2] sm:$0xff] %v139
    // Predicated region
    $region34: #{tpu_custom_call.1} parent=1 // pred_check
      %p141 = pneg %p54
    $region35: #{tpu_custom_call.1} parent=1 // pred_check_branch
      %143 = sbr.rel (%p141) target = $region37
    $region36: #{tpu_custom_call.1} parent=1 // pred_region
      %v144 = vld [vmem:[#allocation2] sm:$0xff]
      %v145 = vmul.f32 %v144, 0.125
      %v146 = vld [vmem:[#allocation7] sm:$0xff]
      %v147 = vld [vmem:[#allocation7 + $0x8] sm:$0xff]
      %v148 = vld [vmem:[#allocation7 + $0x10] sm:$0xff]
      %v149 = vld [vmem:[#allocation7 + $0x18] sm:$0xff]
      %v150 = vld [vmem:[#allocation7 + $0x20] sm:$0xff]
      %v151 = vld [vmem:[#allocation7 + $0x28] sm:$0xff]
      %v152 = vld [vmem:[#allocation7 + $0x30] sm:$0xff]
      %v153 = vld [vmem:[#allocation7 + $0x38] sm:$0xff]
      %v154 = vld [vmem:[#allocation7 + $0x40] sm:$0xff]
      %v155 = vld [vmem:[#allocation7 + $0x48] sm:$0xff]
      %v156 = vld [vmem:[#allocation7 + $0x50] sm:$0xff]
      %v157 = vld [vmem:[#allocation7 + $0x58] sm:$0xff]
      %v158 = vld [vmem:[#allocation7 + $0x60] sm:$0xff]
      %v159 = vld [vmem:[#allocation7 + $0x68] sm:$0xff]
      %v160 = vld [vmem:[#allocation7 + $0x70] sm:$0xff]
      %v161 = vld [vmem:[#allocation7 + $0x78] sm:$0xff]
      %v162 = vld [vmem:[#allocation7 + $0x80] sm:$0xff]
      %v163 = vld [vmem:[#allocation7 + $0x88] sm:$0xff]
      %v164 = vld [vmem:[#allocation7 + $0x90] sm:$0xff]
      %v165 = vld [vmem:[#allocation7 + $0x98] sm:$0xff]
      %v166 = vld [vmem:[#allocation7 + $0xa0] sm:$0xff]
      %v167 = vld [vmem:[#allocation7 + $0xa8] sm:$0xff]
      %v168 = vld [vmem:[#allocation7 + $0xb0] sm:$0xff]
      %v169 = vld [vmem:[#allocation7 + $0xb8] sm:$0xff]
      %v170 = vld [vmem:[#allocation7 + $0xc0] sm:$0xff]
      %v171 = vld [vmem:[#allocation7 + $0xc8] sm:$0xff]
      %v172 = vld [vmem:[#allocation7 + $0xd0] sm:$0xff]
      %v173 = vld [vmem:[#allocation7 + $0xd8] sm:$0xff]
      %v174 = vld [vmem:[#allocation7 + $0xe0] sm:$0xff]
      %v175 = vld [vmem:[#allocation7 + $0xe8] sm:$0xff]
      %v176 = vld [vmem:[#allocation7 + $0xf0] sm:$0xff]
      %v177 = vld [vmem:[#allocation7 + $0xf8] sm:$0xff]
      %v178 = vld [vmem:[%s2] sm:$0x3]
      %v180 = vperm.slane %v178, 0
      %v181 = vperm.slane %v178, 1
      %184 = vmatpush.msra.mxu0 %v176
      %185 = vmatpush.msra.mxu0 %v174
      %186 = vmatpush.msra.mxu0 %v172
      %187 = vmatpush.msra.mxu0 %v170
      %188 = vmatpush.msra.mxu0 %v168
      %189 = vmatpush.msra.mxu0 %v166
      %190 = vmatpush.msra.mxu0 %v164
      %191 = vmatpush.msra.mxu0 %v162
      %192 = vmatpush.msra.mxu0 %v160
      %193 = vmatpush.msra.mxu0 %v158
      %194 = vmatpush.msra.mxu0 %v156
      %195 = vmatpush.msra.mxu0 %v154
      %196 = vmatpush.msra.mxu0 %v152
      %197 = vmatpush.msra.mxu0 %v150
      %198 = vmatpush.msra.mxu0 %v148
      %199 = vmatpush.msra.mxu0 %v146
      %200 = vmatmul.f32.gmra.mxu0 %v145
      %v201 = vpop.f32.mrf.mxu0
      %v202 = vadd.f32 %v180, %v201
      %203 = vdwg.mxu0
      %204 = vmatpush.msra.mxu0 %v177
      %205 = vmatpush.msra.mxu0 %v175
      %206 = vmatpush.msra.mxu0 %v173
      %207 = vmatpush.msra.mxu0 %v171
      %208 = vmatpush.msra.mxu0 %v169
      %209 = vmatpush.msra.mxu0 %v167
      %210 = vmatpush.msra.mxu0 %v165
      %211 = vmatpush.msra.mxu0 %v163
      %212 = vmatpush.msra.mxu0 %v161
      %213 = vmatpush.msra.mxu0 %v159
      %214 = vmatpush.msra.mxu0 %v157
      %215 = vmatpush.msra.mxu0 %v155
      %216 = vmatpush.msra.mxu0 %v153
      %217 = vmatpush.msra.mxu0 %v151
      %218 = vmatpush.msra.mxu0 %v149
      %219 = vmatpush.msra.mxu0 %v147
      %220 = vmatmul.f32.gmra.mxu0 %v145
      %v221 = vpop.f32.mrf.mxu0
      %v222 = vadd.f32 %v181, %v221
      %223 = vdwg.mxu0
      %v224 = vmax.f32 %v202, 0.0
      %v225 = vmax.f32 %v222, 0.0
      %v226 = vld [vmem:[%s3] sm:$0x3]
      %v228 = vperm.slane %v226, 0
      %v229 = vperm.slane %v226, 1
      %v232 = vmul.f32 %v224, %v228
      %v233 = vmul.f32 %v225, %v229
      %v234 = vadd.f32 %v232, %v233
      %235 = vadd.xlane.f32.xlu0 %v234
      %v236 = vpop.xlane.xlu0 %235
      %s237 = sld [smem:[#allocation3]]
      %v238 = vstv %s237
      %v239 = vadd.f32 %v236, %v238
      %v240 = vsub.f32 0.0, %v239
      %v241 = vmul.f32 %v240, 1.442695
      %v242 = vpow.pop %v241
      %v243 = vadd.f32 %v242, 1.0
      %v244 = vrcp.pop %v243
      %v245 = vmul.f32 %v243, %v244
      %v246 = vsub.f32 1.0, %v245
      %v247 = vmul.f32 %v244, %v246
      %v248 = vadd.f32 %v244, %v247
      %vm249 = vweird.f32 %v243
      %vm250 = vweird.f32 %v244
      %vm251 = vmor %vm249, %vm250
      %v252 = vsel %vm251, %v244, %v248
      %v253 = vand.u32 2147483647, %v243
      %vm254 = vcmp.eq.f32.partialorder %v253, 8.507059e+37
      %v255 = vand.u32 %v243, 2147483648
      %v256 = vor.u32 1.1754944e-38, %v255
      %v257 = vsel %vm254, %v256, %v252
      %v258 = vmul.f32 1.0, %v257
      %v260 = vlaneseq
      %v261 = vand.u32 %v260, 127
      %v262 = vperm.slane %v258, %v261
      %vm264 = vcmask 57344
      %265 = vst.msk [vmem:[#allocation9] sm:$0x1] %vm264, %v262
    $region37: #{tpu_custom_call.1} parent=1 // pred_fallthru
      _
    // Predicated region
    $region38: #{tpu_custom_call.1} parent=1 // pred_check
      _
    $region39: #{tpu_custom_call.1} parent=1 // pred_check_branch
      %267 = sbr.rel (0) target = $region41
    $region40: #{tpu_custom_call.1} parent=1 // pred_region
      %269 = vsyncadd [#allocation6], 0
      %s271 = sshll.u32 [#allocation9], 4
      %s272 = int_to_ptr.vmem [resolvable:$true] %s271
      %s273 = sshll.u32 %s5, 4
      %s274 = int_to_ptr.hbm [resolvable:$true] %s273
      %276 = dma.vmem_to_hbm [thread:$0]  %s272, 16, %s274, [#allocation6]
    $region41: #{tpu_custom_call.1} parent=1 // pred_fallthru
      _
    // Predicated region
    $region42: #{tpu_custom_call.1} parent=1 // pred_check
      _
    $region43: #{tpu_custom_call.1} parent=1 // pred_check_branch
      %278 = sbr.rel (0) target = $region45
    $region44: #{tpu_custom_call.1} parent=1 // pred_region
      %280 = dma.done [#allocation6], 16
    $region45: #{tpu_custom_call.1} parent=1 // pred_fallthru
      _
    %281 = vsyncpa [#allocation5], 1
    %282 = vsyncpa [#allocation8], 1
    %283 = vsyncpa [#allocation6], 1

</llo_original>
